<compile_context>
chip_gen: v6e
topology: v6e:2x2x1
jax: 0.10.0
libtpu: 0.0.40
codegen_flags: <defaults>
</compile_context>

<pallas_src>
import math

import jax
import jax.numpy as jnp
from jax import lax
from jax.experimental import pallas as pl
from jax.experimental.pallas import tpu as pltpu


# ------------------------------ small helpers ------------------------------

def _layer_norm(x, gamma, beta, eps=1e-6):
    mu = jnp.mean(x, axis=-1, keepdims=True)
    var = jnp.mean((x - mu) ** 2, axis=-1, keepdims=True)
    return (x - mu) * lax.rsqrt(var + eps) * gamma + beta


def _bytes(shape, dtype):
    return math.prod(shape) * jnp.dtype(dtype).itemsize


def _vmem_cap_bytes():
    """Generation-aware VMEM cap: ~3/4 of physical VMEM, safe fallback otherwise."""
    try:
        info = pltpu.get_tpu_info()
        cap = getattr(info, "vmem_capacity_bytes", None)
        if cap:
            return int(cap * 3 // 4)
    except Exception:
        pass
    return 48 << 20          # safe on v5e/v6e (128 MiB) and v7x (64 MiB)


def _default_q_tile():
    """MXU-matched query tile: 128 on v5e (4x128^2 MXU), 256 on v6e/v7x (2x256^2)."""
    try:
        kind = jax.devices()[0].device_kind.lower()
        if "v5e" in kind or "v5 lite" in kind or "v5litepod" in kind:
            return 128
    except Exception:
        pass
    return 256


def _pick_tile(length, target):
    """Largest divisor of `length` that is <= target and (multiple of 8 or == length)."""
    for c in range(min(length, target), 0, -1):
        if length % c == 0 and (c % 8 == 0 or c == length):
            return c
    return length


def prepare_decoder_params(params):
    """One-time weight preparation (pre-cast matmul weights to bf16; keep biases/LN in f32)."""
    bf16, f32 = jnp.bfloat16, jnp.float32
    prepared = {}
    for name in ("wq", "wk", "wv", "fc_w", "w1", "w2"):
        prepared[name] = params[name].astype(bf16)
    for name in ("fc_b", "ln1_g", "ln1_b", "b1", "b2", "ln2_g", "ln2_b"):
        prepared[name] = params[name].astype(f32)
    return prepared


# ------------------------- kernel 1: K/V projections -------------------------

def _make_kv_proj_kernel(*, n_head, d_k, d_v):
    def kernel(k_ref, v_ref, wk_ref, wv_ref, kh_ref, vh_ref):
        # Wide projections (full MXU fill along N = H*d_k / H*d_v); the per-head lane-slice
        # relayout into head-major storage happens once per K/V tile, amortized over every
        # query tile that reuses it in the main kernel.
        k_all = jnp.dot(k_ref[...], wk_ref[...], preferred_element_type=jnp.float32)
        v_all = jnp.dot(v_ref[...], wv_ref[...], preferred_element_type=jnp.float32)
        for h in range(n_head):                       # static unroll, n_head is small
            kh_ref[h] = k_all[:, h * d_k:(h + 1) * d_k].astype(kh_ref.dtype)
            vh_ref[h] = v_all[:, h * d_v:(h + 1) * d_v].astype(vh_ref.dtype)
    return kernel


def _project_kv(k_b, v_b, wk, wv, *, n_head, d_k, d_v, tk):
    """Compute head-major bf16 K/V projections once per batch: (B, H, Lk, d_k/d_v)."""
    B, Lk, D = k_b.shape
    H = n_head
    n_k_tiles = Lk // tk

    changing = (2 * _bytes((tk, D), jnp.bfloat16)
                + _bytes((H, tk, d_k), jnp.bfloat16)
                + _bytes((H, tk, d_v), jnp.bfloat16))
    const = _bytes(wk.shape, wk.dtype) + _bytes(wv.shape, wv.dtype)
    vmem_limit = int(min(max(2 * changing + const + (8 << 20), 16 << 20), _vmem_cap_bytes()))

    kernel = _make_kv_proj_kernel(n_head=H, d_k=d_k, d_v=d_v)

    kh, vh = pl.pallas_call(
        kernel,
        out_shape=(jax.ShapeDtypeStruct((B, H, Lk, d_k), jnp.bfloat16),
                   jax.ShapeDtypeStruct((B, H, Lk, d_v), jnp.bfloat16)),
        grid_spec=pltpu.PrefetchScalarGridSpec(
            num_scalar_prefetch=0,
            grid=(B, n_k_tiles),
            in_specs=[
                pl.BlockSpec((None, tk, D), lambda b, s: (b, s, 0)),       # K tile (bf16)
                pl.BlockSpec((None, tk, D), lambda b, s: (b, s, 0)),       # V tile (bf16)
                pl.BlockSpec(wk.shape, lambda b, s: (0, 0)),               # Wk (D, H*d_k)
                pl.BlockSpec(wv.shape, lambda b, s: (0, 0)),               # Wv (D, H*d_v)
            ],
            out_specs=(
                pl.BlockSpec((None, H, tk, d_k), lambda b, s: (b, 0, s, 0)),
                pl.BlockSpec((None, H, tk, d_v), lambda b, s: (b, 0, s, 0)),
            ),
        ),
        compiler_params=pltpu.CompilerParams(
            dimension_semantics=("parallel", "parallel"),
            vmem_limit_bytes=vmem_limit),
    )(k_b, v_b, wk, wv)
    return kh, vh


# -------------------- kernel 2: fused MHA + FFN per (b, q-tile) --------------------

def _make_decoder_kernel(*, n_head, d_k, d_v, inv_temperature, with_attn, gelu_approximate):
    def kernel(q_ref, kh_ref, vh_ref,
               wq_ref, fcw_ref, fcb_ref, ln1g_ref, ln1b_ref,
               w1_ref, b1_ref, w2_ref, b2_ref, ln2g_ref, ln2b_ref,
               out_ref, *rest):
        if with_attn:
            attn_ref, ctx_ref = rest
        else:
            attn_ref = None
            (ctx_ref,) = rest

        q_in = q_ref[...]                        # (tq, D) f32
        residual = q_in

        # ------------- MultiHeadAttention (normalize_before=True, eval dropout) -------------
        qn = _layer_norm(q_in, ln1g_ref[...], ln1b_ref[...])
        # Fold 1/temperature into the normalized query once; MXU inputs are bf16.
        q_b = (qn * inv_temperature).astype(jnp.bfloat16)
        q_all = jnp.dot(q_b, wq_ref[...],
                        preferred_element_type=jnp.float32).astype(jnp.bfloat16)   # (tq, H*d_k)

        # TODO(synk): slf_attn_mask (-1e9 masked_fill before softmax) not wired; callers pass None.
        for h in range(n_head):                  # static unroll over heads
            qh = q_all[:, h * d_k:(h + 1) * d_k]            # (tq, d_k) bf16
            kh = kh_ref[h]                                  # (Lk, d_k) bf16, head-major
            vh = vh_ref[h]                                  # (Lk, d_v) bf16
            # NT contraction (contract last dims): MXU consumes K directly, no transpose.
            scores = lax.dot_general(qh, kh, (((1,), (1,)), ((), ())),
                                     preferred_element_type=jnp.float32)  # (tq, Lk)
            scores = scores - jnp.max(scores, axis=-1, keepdims=True)
            e = jnp.exp(scores)
            attn = e * pl.reciprocal(jnp.sum(e, axis=-1, keepdims=True), approx=True)
            if attn_ref is not None:
                attn_ref[h] = attn.astype(attn_ref.dtype)
            ctx = jnp.dot(attn.astype(jnp.bfloat16), vh,
                          preferred_element_type=jnp.float32)             # (tq, d_v)
            ctx_ref[:, h * d_v:(h + 1) * d_v] = ctx          # static lane offset into scratch

        # One wide output projection (contraction H*d_v) instead of per-head folds.
        o = jnp.dot(ctx_ref[...].astype(jnp.bfloat16), fcw_ref[...],
                    preferred_element_type=jnp.float32) + fcb_ref[...] + residual

        # ------------- PositionwiseFeedForward (normalize_before=True) -------------
        residual2 = o
        xn = _layer_norm(o, ln2g_ref[...], ln2b_ref[...])
        h1 = jnp.dot(xn.astype(jnp.bfloat16), w1_ref[...],
                     preferred_element_type=jnp.float32) + b1_ref[...]
        h1 = jax.nn.gelu(h1, approximate=gelu_approximate)   # default: exact erf, matches torch
        ff = jnp.dot(h1.astype(jnp.bfloat16), w2_ref[...],
                     preferred_element_type=jnp.float32) + b2_ref[...]
        out_ref[...] = (ff + residual2).astype(out_ref.dtype)

    return kernel


def decoder_layer(q, k, v, prepared, *, n_head, d_k, d_v,
                  return_attn=True, attn_dtype=jnp.float32,
                  tq=None, tk=None, gelu_approximate=False):
    """Pallas DecoderLayer forward.  q: (B, Lq, D); k, v: (B, Lk, D); `prepared` from
    prepare_decoder_params().  Returns (enc_output, enc_slf_attn or None)."""
    B, Lq, D = q.shape
    Lk = k.shape[1]
    H = n_head

    tq = _pick_tile(Lq, _default_q_tile() if tq is None else tq)
    tk = _pick_tile(Lk, 512 if tk is None else tk)
    n_q_tiles = Lq // tq

    q = q.astype(jnp.float32)
    k_b = k.astype(jnp.bfloat16)      # halve K/V DMA + VMEM (only Q stays f32 for LN/residual)
    v_b = v.astype(jnp.bfloat16)

    # Hoisted K/V projections: computed once per batch, reused by every query tile.
    kh, vh = _project_kv(k_b, v_b, prepared["wk"], prepared["wv"],
                         n_head=H, d_k=d_k, d_v=d_v, tk=tk)

    kernel = _make_decoder_kernel(
        n_head=H, d_k=d_k, d_v=d_v, inv_temperature=1.0 / math.sqrt(d_k),
        with_attn=return_attn, gelu_approximate=gelu_approximate)

    wq, fc_w, w1, w2 = prepared["wq"], prepared["fc_w"], prepared["w1"], prepared["w2"]
    fc_b, b1, b2 = prepared["fc_b"], prepared["b1"], prepared["b2"]
    ln1_g, ln1_b = prepared["ln1_g"], prepared["ln1_b"]
    ln2_g, ln2_b = prepared["ln2_g"], prepared["ln2_b"]

    def full_spec(arr):
        nd = arr.ndim
        return pl.BlockSpec(arr.shape, lambda b, t, nd=nd: (0,) * nd)

    in_specs = [
        pl.BlockSpec((None, tq, D), lambda b, t: (b, t, 0)),             # Q tile (f32)
        pl.BlockSpec((None, H, Lk, d_k), lambda b, t: (b, 0, 0, 0)),     # K heads (bf16)
        pl.BlockSpec((None, H, Lk, d_v), lambda b, t: (b, 0, 0, 0)),     # V heads (bf16)
        full_spec(wq), full_spec(fc_w), full_spec(fc_b),
        full_spec(ln1_g), full_spec(ln1_b),
        full_spec(w1), full_spec(b1), full_spec(w2), full_spec(b2),
        full_spec(ln2_g), full_spec(ln2_b),
    ]

    out_specs = [pl.BlockSpec((None, tq, D), lambda b, t: (b, t, 0))]
    out_shapes = [jax.ShapeDtypeStruct((B, Lq, D), jnp.float32)]
    if return_attn:
        # On v7x with large Lk, pass attn_dtype=jnp.bfloat16 (or return_attn=False) to halve
        # the dominant VMEM block / HBM writeback.
        out_specs.append(pl.BlockSpec((None, H, tq, Lk), lambda b, t: (b, 0, t, 0)))
        out_shapes.append(jax.ShapeDtypeStruct((B, H, Lq, Lk), attn_dtype))

    # VMEM budget: 2x for per-step-changing blocks, 1x for constant weight blocks, + headroom
    # for in-kernel (tq, Lk) score/exp intermediates; capped per generation.
    changing = (2 * _bytes((tq, D), jnp.float32)                  # Q tile + out tile
                + _bytes((H, Lk, d_k), jnp.bfloat16)
                + _bytes((H, Lk, d_v), jnp.bfloat16))
    if return_attn:
        changing += _bytes((H, tq, Lk), attn_dtype)
    const = sum(_bytes(a.shape, a.dtype) for a in
                (wq, fc_w, fc_b, ln1_g, ln1_b, w1, b1, w2, b2, ln2_g, ln2_b))
    scratch = _bytes((tq, H * d_v), jnp.float32)
    headroom = (8 << 20) + 4 * _bytes((tq, Lk), jnp.float32)
    vmem_limit = int(min(max(2 * changing + const + scratch + headroom, 16 << 20),
                         _vmem_cap_bytes()))

    outs = pl.pallas_call(
        kernel,
        out_shape=tuple(out_shapes),
        grid_spec=pltpu.PrefetchScalarGridSpec(
            num_scalar_prefetch=0,
            grid=(B, n_q_tiles),
            in_specs=in_specs,
            out_specs=tuple(out_specs),
            scratch_shapes=[pltpu.VMEM((tq, H * d_v), jnp.float32)],     # ctx concat buffer
        ),
        compiler_params=pltpu.CompilerParams(
            dimension_semantics=("parallel", "parallel"),
            vmem_limit_bytes=vmem_limit),
    )(q, kh, vh, wq, fc_w, fc_b, ln1_g, ln1_b, w1, b1, w2, b2, ln2_g, ln2_b)

    if return_attn:
        return outs[0], outs[1]
    return outs[0], None


# ------------------------------ pure-JAX reference ------------------------------

def reference(q, k, v, params, *, n_head, d_k, d_v):
    """Exact f32 reference of the DecoderLayer forward (eval mode, normalize_before=True)."""
    hp = lax.Precision.HIGHEST

    def ln(x, g, b, eps=1e-6):
        mu = jnp.mean(x, -1, keepdims=True)
        var = jnp.mean((x - mu) ** 2, -1, keepdims=True)
        return (x - mu) * lax.rsqrt(var + eps) * g + b

    def mm(a, w):
        return jnp.einsum("bld,de->ble", a, w, precision=hp)

    B, Lq, D = q.shape
    Lk = k.shape[1]
    inv_temp = 1.0 / math.sqrt(d_k)

    residual = q
    qn = ln(q, params["ln1_g"][0], params["ln1_b"][0])
    Q = mm(qn, params["wq"]).reshape(B, Lq, n_head, d_k).transpose(0, 2, 1, 3)
    K = mm(k, params["wk"]).reshape(B, Lk, n_head, d_k).transpose(0, 2, 1, 3)
    V = mm(v, params["wv"]).reshape(B, Lk, n_head, d_v).transpose(0, 2, 1, 3)
    scores = jnp.einsum("bhqd,bhkd->bhqk", Q, K, precision=hp) * inv_temp
    attn = jax.nn.softmax(scores, axis=-1)
    ctx = jnp.einsum("bhqk,bhkd->bhqd", attn, V, precision=hp)
    ctx = ctx.transpose(0, 2, 1, 3).reshape(B, Lq, n_head * d_v)
    o = mm(ctx, params["fc_w"]) + params["fc_b"][0] + residual
    residual2 = o
    xn = ln(o, params["ln2_g"][0], params["ln2_b"][0])
    h1 = jax.nn.gelu(mm(xn, params["w1"]) + params["b1"][0], approximate=False)
    ff = mm(h1, params["w2"]) + params["b2"][0]
    return ff + residual2, attn


# ------------------------------------- main -------------------------------------

if __name__ == "__main__":
    B, Lq, Lk = 2, 8, 8
    d_model, d_inner, n_head, d_k, d_v = 32, 64, 2, 16, 16

    key = jax.random.PRNGKey(0)
    keys = jax.random.split(key, 12)

    def xavier(kk, shape):
        limit = math.sqrt(6.0 / (shape[0] + shape[1]))
        return jax.random.uniform(kk, shape, jnp.float32, -limit, limit)

    params = {
        "wq": xavier(keys[0], (d_model, n_head * d_k)),
        "wk": xavier(keys[1], (d_model, n_head * d_k)),
        "wv": xavier(keys[2], (d_model, n_head * d_v)),
        "fc_w": xavier(keys[3], (n_head * d_v, d_model)),
        "fc_b": 0.01 * jax.random.normal(keys[4], (1, d_model), jnp.float32),
        "ln1_g": jnp.ones((1, d_model), jnp.float32),
        "ln1_b": jnp.zeros((1, d_model), jnp.float32),
        "w1": xavier(keys[5], (d_model, d_inner)),
        "b1": 0.01 * jax.random.normal(keys[6], (1, d_inner), jnp.float32),
        "w2": xavier(keys[7], (d_inner, d_model)),
        "b2": 0.01 * jax.random.normal(keys[8], (1, d_model), jnp.float32),
        "ln2_g": jnp.ones((1, d_model), jnp.float32),
        "ln2_b": jnp.zeros((1, d_model), jnp.float32),
    }

    q = jax.random.normal(keys[9], (B, Lq, d_model), jnp.float32)
    k = jax.random.normal(keys[10], (B, Lk, d_model), jnp.float32)
    v = jax.random.normal(keys[11], (B, Lk, d_model), jnp.float32)

    prepared = prepare_decoder_params(params)     # one-time bf16 weight cast

    out, attn = decoder_layer(q, k, v, prepared, n_head=n_head, d_k=d_k, d_v=d_v)
    out = jax.block_until_ready(out)
    attn = jax.block_until_ready(attn)

    ref_out, ref_attn = reference(q, k, v, params, n_head=n_head, d_k=d_k, d_v=d_v)

    assert out.shape == (B, Lq, d_model)
    assert attn.shape == (B, n_head, Lq, Lk)
    # Tolerances sized for bf16 MXU inputs (f32 accumulation) + approx softmax reciprocal,
    # checked against the exact f32 module semantics.
    err_out = float(jnp.max(jnp.abs(out - ref_out)))
    err_attn = float(jnp.max(jnp.abs(attn - ref_attn)))
    assert err_out < 1.5e-1, f"out max abs err {err_out}"
    assert err_attn < 5e-2, f"attn max abs err {err_attn}"
    print("KERNEL_OK")
</pallas_src>

<mosaic_0001>
module attributes {stable_mosaic.version = 11 : i64} {
  func.func @kernel(%arg0: i32, %arg1: i32, %arg2: memref<1x8x32xbf16, #tpu.memory_space<vmem>>, %arg3: memref<1x8x32xbf16, #tpu.memory_space<vmem>>, %arg4: memref<32x32xbf16, #tpu.memory_space<vmem>>, %arg5: memref<32x32xbf16, #tpu.memory_space<vmem>>, %arg6: memref<1x2x8x16xbf16, #tpu.memory_space<vmem>>, %arg7: memref<1x2x8x16xbf16, #tpu.memory_space<vmem>>) attributes {dimension_semantics = [#tpu.dimension_semantics<parallel>, #tpu.dimension_semantics<parallel>], iteration_bounds = array<i64: 2, 1>, scalar_prefetch = 0 : i64, scratch_operands = 0 : i64, tpu.core_type = #tpu.core_type<tc>, window_params = [{transform_indices = @transform_0, window_bounds = array<i64: 1, 8, 32>}, {transform_indices = @transform_1, window_bounds = array<i64: 1, 8, 32>}, {pipeline_mode = #tpu.pipeline_mode<synchronous>, transform_indices = @transform_2, window_bounds = array<i64: 32, 32>}, {pipeline_mode = #tpu.pipeline_mode<synchronous>, transform_indices = @transform_3, window_bounds = array<i64: 32, 32>}, {transform_indices = @transform_4, window_bounds = array<i64: 1, 2, 8, 16>}, {transform_indices = @transform_5, window_bounds = array<i64: 1, 2, 8, 16>}]} {
    %c0 = arith.constant 0 : index
    %c0_0 = arith.constant 0 : index
    %c0_1 = arith.constant 0 : index
    %0 = vector.load %arg2[%c0, %c0_0, %c0_1] : memref<1x8x32xbf16, #tpu.memory_space<vmem>>, vector<1x8x32xbf16>
    %1 = vector.shape_cast %0 : vector<1x8x32xbf16> to vector<8x32xbf16>
    %c0_2 = arith.constant 0 : index
    %c0_3 = arith.constant 0 : index
    %2 = vector.load %arg4[%c0_2, %c0_3] : memref<32x32xbf16, #tpu.memory_space<vmem>>, vector<32x32xbf16>
    %cst = arith.constant dense<0.000000e+00> : vector<8x32xf32>
    %3 = tpu.matmul %1, %2, %cst {dimension_numbers = #tpu.dot_dimension_numbers<[1], [0], [0], [1], [0, 0, 1, 1], [], []>} : vector<8x32xbf16>, vector<32x32xbf16>, vector<8x32xf32> -> vector<8x32xf32>
    %c0_4 = arith.constant 0 : index
    %c0_5 = arith.constant 0 : index
    %c0_6 = arith.constant 0 : index
    %4 = vector.load %arg3[%c0_4, %c0_5, %c0_6] : memref<1x8x32xbf16, #tpu.memory_space<vmem>>, vector<1x8x32xbf16>
    %5 = vector.shape_cast %4 : vector<1x8x32xbf16> to vector<8x32xbf16>
    %c0_7 = arith.constant 0 : index
    %c0_8 = arith.constant 0 : index
    %6 = vector.load %arg5[%c0_7, %c0_8] : memref<32x32xbf16, #tpu.memory_space<vmem>>, vector<32x32xbf16>
    %cst_9 = arith.constant dense<0.000000e+00> : vector<8x32xf32>
    %7 = tpu.matmul %5, %6, %cst_9 {dimension_numbers = #tpu.dot_dimension_numbers<[1], [0], [0], [1], [0, 0, 1, 1], [], []>} : vector<8x32xbf16>, vector<32x32xbf16>, vector<8x32xf32> -> vector<8x32xf32>
    %8 = vector.extract_strided_slice %3 {offsets = [0, 0], sizes = [8, 16], strides = [1, 1]} : vector<8x32xf32> to vector<8x16xf32>
    %9 = arith.truncf %8 : vector<8x16xf32> to vector<8x16xbf16>
    %c0_10 = arith.constant 0 : index
    %c0_11 = arith.constant 0 : index
    %c0_12 = arith.constant 0 : index
    %c0_13 = arith.constant 0 : index
    %10 = vector.load %arg6[%c0_10, %c0_11, %c0_12, %c0_13] : memref<1x2x8x16xbf16, #tpu.memory_space<vmem>>, vector<1x1x8x16xbf16>
    %11 = vector.shape_cast %10 : vector<1x1x8x16xbf16> to vector<8x16xbf16>
    %12 = vector.shape_cast %9 : vector<8x16xbf16> to vector<1x1x8x16xbf16>
    tpu.vector_store %arg6[%c0_10, %c0_11, %c0_12, %c0_13], %12 {strides = array<i32>} : memref<1x2x8x16xbf16, #tpu.memory_space<vmem>>, vector<1x1x8x16xbf16>,
    %13 = vector.extract_strided_slice %7 {offsets = [0, 0], sizes = [8, 16], strides = [1, 1]} : vector<8x32xf32> to vector<8x16xf32>
    %14 = arith.truncf %13 : vector<8x16xf32> to vector<8x16xbf16>
    %c0_14 = arith.constant 0 : index
    %c0_15 = arith.constant 0 : index
    %c0_16 = arith.constant 0 : index
    %c0_17 = arith.constant 0 : index
    %15 = vector.load %arg7[%c0_14, %c0_15, %c0_16, %c0_17] : memref<1x2x8x16xbf16, #tpu.memory_space<vmem>>, vector<1x1x8x16xbf16>
    %16 = vector.shape_cast %15 : vector<1x1x8x16xbf16> to vector<8x16xbf16>
    %17 = vector.shape_cast %14 : vector<8x16xbf16> to vector<1x1x8x16xbf16>
    tpu.vector_store %arg7[%c0_14, %c0_15, %c0_16, %c0_17], %17 {strides = array<i32>} : memref<1x2x8x16xbf16, #tpu.memory_space<vmem>>, vector<1x1x8x16xbf16>,
    %18 = vector.extract_strided_slice %3 {offsets = [0, 16], sizes = [8, 16], strides = [1, 1]} : vector<8x32xf32> to vector<8x16xf32>
    %19 = arith.truncf %18 : vector<8x16xf32> to vector<8x16xbf16>
    %c0_18 = arith.constant 0 : index
    %c1 = arith.constant 1 : index
    %c0_19 = arith.constant 0 : index
    %c0_20 = arith.constant 0 : index
    %20 = vector.load %arg6[%c0_18, %c1, %c0_19, %c0_20] : memref<1x2x8x16xbf16, #tpu.memory_space<vmem>>, vector<1x1x8x16xbf16>
    %21 = vector.shape_cast %20 : vector<1x1x8x16xbf16> to vector<8x16xbf16>
    %22 = vector.shape_cast %19 : vector<8x16xbf16> to vector<1x1x8x16xbf16>
    tpu.vector_store %arg6[%c0_18, %c1, %c0_19, %c0_20], %22 {strides = array<i32>} : memref<1x2x8x16xbf16, #tpu.memory_space<vmem>>, vector<1x1x8x16xbf16>,
    %23 = vector.extract_strided_slice %7 {offsets = [0, 16], sizes = [8, 16], strides = [1, 1]} : vector<8x32xf32> to vector<8x16xf32>
    %24 = arith.truncf %23 : vector<8x16xf32> to vector<8x16xbf16>
    %c0_21 = arith.constant 0 : index
    %c1_22 = arith.constant 1 : index
    %c0_23 = arith.constant 0 : index
    %c0_24 = arith.constant 0 : index
    %25 = vector.load %arg7[%c0_21, %c1_22, %c0_23, %c0_24] : memref<1x2x8x16xbf16, #tpu.memory_space<vmem>>, vector<1x1x8x16xbf16>
    %26 = vector.shape_cast %25 : vector<1x1x8x16xbf16> to vector<8x16xbf16>
    %27 = vector.shape_cast %24 : vector<8x16xbf16> to vector<1x1x8x16xbf16>
    tpu.vector_store %arg7[%c0_21, %c1_22, %c0_23, %c0_24], %27 {strides = array<i32>} : memref<1x2x8x16xbf16, #tpu.memory_space<vmem>>, vector<1x1x8x16xbf16>,
    return
  }
  func.func @transform_0(%arg0: i32, %arg1: i32) -> (i32, i32, i32) {
    %c0_i32 = arith.constant 0 : i32
    %c0_i32_0 = arith.constant 0 : i32
    return %arg0, %arg1, %c0_i32 : i32, i32, i32
  }
  func.func @transform_1(%arg0: i32, %arg1: i32) -> (i32, i32, i32) {
    %c0_i32 = arith.constant 0 : i32
    %c0_i32_0 = arith.constant 0 : i32
    return %arg0, %arg1, %c0_i32 : i32, i32, i32
  }
  func.func @transform_2(%arg0: i32, %arg1: i32) -> (i32, i32) {
    %c0_i32 = arith.constant 0 : i32
    %c0_i32_0 = arith.constant 0 : i32
    %c0_i32_1 = arith.constant 0 : i32
    return %c0_i32, %c0_i32_0 : i32, i32
  }
  func.func @transform_3(%arg0: i32, %arg1: i32) -> (i32, i32) {
    %c0_i32 = arith.constant 0 : i32
    %c0_i32_0 = arith.constant 0 : i32
    %c0_i32_1 = arith.constant 0 : i32
    return %c0_i32, %c0_i32_0 : i32, i32
  }
  func.func @transform_4(%arg0: i32, %arg1: i32) -> (i32, i32, i32, i32) {
    %c0_i32 = arith.constant 0 : i32
    %c0_i32_0 = arith.constant 0 : i32
    %c0_i32_1 = arith.constant 0 : i32
    return %arg0, %c0_i32, %arg1, %c0_i32_0 : i32, i32, i32, i32
  }
  func.func @transform_5(%arg0: i32, %arg1: i32) -> (i32, i32, i32, i32) {
    %c0_i32 = arith.constant 0 : i32
    %c0_i32_0 = arith.constant 0 : i32
    %c0_i32_1 = arith.constant 0 : i32
    return %arg0, %c0_i32, %arg1, %c0_i32_0 : i32, i32, i32, i32
  }
}

</mosaic_0001>

<llo_original>
// kernel: tpu_custom_call.1
$region0: #{tpu_custom_call.1}
  #allocation0 [shape = 'u32[]', space=smem, size = 0x4, offset = 0x4, fixed_abs, tag = 'smem constant byte address 0x4 - core index']
  #allocation1 [shape = 'u32[144,128]{1,0:T(1,128)}', space=vmem, size = 0x12000, scoped, tag = 'internal scratch']
  %s0 = inlined_call_operand.hbm [shape: bf16[2,8,32], index: 0, kind: input, shape index: {}]
  %s1 = inlined_call_operand.hbm [shape: bf16[2,8,32], index: 1, kind: input, shape index: {}]
  %s2 = inlined_call_operand.hbm [shape: bf16[32,32], index: 2, kind: input, shape index: {}]
  %s3 = inlined_call_operand.hbm [shape: bf16[32,32], index: 3, kind: input, shape index: {}]
  %s4 = inlined_call_operand.hbm [shape: bf16[2,2,8,16], index: 4, kind: output, shape index: {0}]
  %s5 = inlined_call_operand.hbm [shape: bf16[2,2,8,16], index: 5, kind: output, shape index: {1}]
  %6 = xla_tuple %s4, %s5
  %s7 = sld [smem:[#allocation0]]
  $region73: #{tpu_custom_call.1} parent=0
    _
  %s9 = ssub.s32 1, %s7
  %s10 = scalar_select 0, %s9, %s7
  $region1: #{tpu_custom_call.1} parent=0
    #allocation2 [shape = 'u8[4096]{0}', space=vmem, size = 0x1000, scoped, tag = 'input window, operand 0']
    #allocation3 [shape = 's32[2]{0}', space=sflag, size = 0x8, scoped, tag = 'scoped memory for tpu_custom_call.1']
    #allocation4 [shape = 's32[2]{0}', space=sflag, size = 0x8, scoped, tag = 'scoped memory for tpu_custom_call.1']
    #allocation5 [shape = 'u8[4096]{0}', space=vmem, size = 0x1000, scoped, tag = 'input window, operand 1']
    #allocation6 [shape = 's32[2]{0}', space=sflag, size = 0x8, scoped, tag = 'scoped memory for tpu_custom_call.1']
    #allocation7 [shape = 'u8[8192]{0}', space=vmem, size = 0x2000, scoped, tag = 'input window, operand 2, single buffered']
    #allocation8 [shape = 'u8[8192]{0}', space=vmem, size = 0x2000, scoped, tag = 'input window, operand 3, single buffered']
    #allocation9 [shape = 's32[1]{0}', space=sflag, size = 0x4, scoped, tag = 'scoped memory for tpu_custom_call.1']
    #allocation10 [shape = 'u8[8192]{0}', space=vmem, size = 0x2000, scoped, tag = 'output window, operand 0']
    #allocation11 [shape = 'u8[8192]{0}', space=vmem, size = 0x2000, scoped, tag = 'output window, operand 1']
    #allocation12 [shape = 's32[2]{0}', space=sflag, size = 0x8, scoped, tag = 'scoped memory for tpu_custom_call.1']
    %11 = vsyncpa [#allocation3], 0
    %s12 = scalar_lea.sflag [#allocation3], 1
    %13 = vsyncpa %s12, 0
    %14 = vsyncpa [#allocation6], 0
    %s15 = scalar_lea.sflag [#allocation6], 1
    %16 = vsyncpa %s15, 0
    %17 = vsyncpa [#allocation9], 0
    %18 = vsyncpa [#allocation4], 0
    %s19 = scalar_lea.sflag [#allocation4], 1
    %20 = vsyncpa %s19, 0
    %21 = vsyncpa [#allocation12], 0
    %s22 = scalar_lea.sflag [#allocation12], 1
    %23 = vsyncpa %s22, 0
    loop: start=0, step=1, limit=4
    $region2: #{tpu_custom_call.1} parent=1 // loop_pre_header
      _
    $region3: #{tpu_custom_call.1} parent=1 // loop_header
      %s25 = sphi 0, %s29
      %p26 = scmp.ge.s32.totalorder %s25, 4
      %s32 = sphi 0, %s44
      %s33 = sphi 0, %s40
      %s34 = sphi 0, %s32
      %s35 = sphi 0, %s33
      %s36 = sphi 0, %s34
      %s37 = sphi 0, %s35
      %s49 = sphi 0, %s51
      %s52 = sphi 0, %s49
      %s53 = sphi 0, %s52
      %s69 = sphi 0, %s53
      %s77 = sphi 0, %s79
      %s80 = sphi 0, %s77
      %s81 = sphi 0, %s80
      %s97 = sphi 0, %s81
      %s101 = sphi 0, %s101
      %s103 = sphi 0, %s101
      %s104 = sphi 0, %s103
      %s118 = sphi 0, %s104
      %s122 = sphi 0, %s122
      %s124 = sphi 0, %s122
      %s125 = sphi 0, %s124
      %s139 = sphi 0, %s125
      %s147 = sphi 0, %s149
      %s150 = sphi 0, %s147
      %s151 = sphi 0, %s150
      %s167 = sphi 0, %s151
      %s175 = sphi 0, %s177
      %s178 = sphi 0, %s175
      %s179 = sphi 0, %s178
      %s195 = sphi 0, %s179
    $region4: #{tpu_custom_call.1} parent=1 // loop_header_branch
      %28 = sbr.rel (%p26) target = $region8
    $region5: #{tpu_custom_call.1} parent=1 // loop_body
      %s30 = ssub.s32 %s25, 1
      %s31 = ssub.s32 %s25, 2
      %s38 = sadd.s32 1, %s33
      %p39 = scmp.ge.s32.totalorder %s38, 1
      %s40 = scalar_select %p39, 0, %s38
      %s41 = sadd.s32 1, %s32
      %s42 = scalar_select %p39, %s41, %s32
      %p43 = scmp.ge.s32.totalorder %s42, 2
      %s44 = scalar_select %p43, 0, %s42
      %s45 = ssub.s32 %s32, %s44
      %s46 = ssub.s32 %s33, %s40
      %s47 = sor.u32 %s45, %s46
      %p48 = scmp.eq.s32.totalorder %s47, 0
      %s50 = sadd.s32 %s49, 1
      %s51 = scalar_select %p48, %s49, %s50
      %p54 = pneg %p48
      %p55 = scmp.eq.s32.totalorder %s25, 1
      %p56 = por %p54, %p55
      %p57 = scmp.ne.s32.totalorder %s49, %s52
      %p58 = scmp.eq.s32.totalorder %s25, 0
      %p59 = por %p57, %p58
      %p60 = scmp.ne.s32.totalorder %s49, %s52
      %p61 = scmp.eq.s32.totalorder %s30, 1
      %p62 = por %p60, %p61
      %p63 = scmp.ne.s32.totalorder %s52, %s53
      %p64 = scmp.eq.s32.totalorder %s30, 0
      %p65 = por %p63, %p64
      %p66 = scmp.ne.s32.totalorder %s52, %s53
      %p67 = scmp.eq.s32.totalorder %s31, 1
      %p68 = por %p66, %p67
      %p70 = scmp.ne.s32.totalorder %s53, %s69
      %p71 = scmp.eq.s32.totalorder %s31, 0
      %p72 = por %p70, %p71
      %s73 = ssub.s32 %s32, %s44
      %s74 = ssub.s32 %s33, %s40
      %s75 = sor.u32 %s73, %s74
      %p76 = scmp.eq.s32.totalorder %s75, 0
      %s78 = sadd.s32 %s77, 1
      %s79 = scalar_select %p76, %s77, %s78
      %p82 = pneg %p76
      %p83 = scmp.eq.s32.totalorder %s25, 1
      %p84 = por %p82, %p83
      %p85 = scmp.ne.s32.totalorder %s77, %s80
      %p86 = scmp.eq.s32.totalorder %s25, 0
      %p87 = por %p85, %p86
      %p88 = scmp.ne.s32.totalorder %s77, %s80
      %p89 = scmp.eq.s32.totalorder %s30, 1
      %p90 = por %p88, %p89
      %p91 = scmp.ne.s32.totalorder %s80, %s81
      %p92 = scmp.eq.s32.totalorder %s30, 0
      %p93 = por %p91, %p92
      %p94 = scmp.ne.s32.totalorder %s80, %s81
      %p95 = scmp.eq.s32.totalorder %s31, 1
      %p96 = por %p94, %p95
      %p98 = scmp.ne.s32.totalorder %s81, %s97
      %p99 = scmp.eq.s32.totalorder %s31, 0
      %p100 = por %p98, %p99
      %s102 = sadd.s32 %s101, 1
      %p105 = scmp.eq.s32.totalorder %s25, 1
      %p106 = scmp.ne.s32.totalorder %s101, %s103
      %p107 = scmp.eq.s32.totalorder %s25, 0
      %p108 = por %p106, %p107
      %p109 = scmp.ne.s32.totalorder %s101, %s103
      %p110 = scmp.eq.s32.totalorder %s30, 1
      %p111 = por %p109, %p110
      %p112 = scmp.ne.s32.totalorder %s103, %s104
      %p113 = scmp.eq.s32.totalorder %s30, 0
      %p114 = por %p112, %p113
      %p115 = scmp.ne.s32.totalorder %s103, %s104
      %p116 = scmp.eq.s32.totalorder %s31, 1
      %p117 = por %p115, %p116
      %p119 = scmp.ne.s32.totalorder %s104, %s118
      %p120 = scmp.eq.s32.totalorder %s31, 0
      %p121 = por %p119, %p120
      %s123 = sadd.s32 %s122, 1
      %p126 = scmp.eq.s32.totalorder %s25, 1
      %p127 = scmp.ne.s32.totalorder %s122, %s124
      %p128 = scmp.eq.s32.totalorder %s25, 0
      %p129 = por %p127, %p128
      %p130 = scmp.ne.s32.totalorder %s122, %s124
      %p131 = scmp.eq.s32.totalorder %s30, 1
      %p132 = por %p130, %p131
      %p133 = scmp.ne.s32.totalorder %s124, %s125
      %p134 = scmp.eq.s32.totalorder %s30, 0
      %p135 = por %p133, %p134
      %p136 = scmp.ne.s32.totalorder %s124, %s125
      %p137 = scmp.eq.s32.totalorder %s31, 1
      %p138 = por %p136, %p137
      %p140 = scmp.ne.s32.totalorder %s125, %s139
      %p141 = scmp.eq.s32.totalorder %s31, 0
      %p142 = por %p140, %p141
      %s143 = ssub.s32 %s32, %s44
      %s144 = ssub.s32 %s33, %s40
      %s145 = sor.u32 %s143, %s144
      %p146 = scmp.eq.s32.totalorder %s145, 0
      %s148 = sadd.s32 %s147, 1
      %s149 = scalar_select %p146, %s147, %s148
      %p152 = pneg %p146
      %p153 = scmp.eq.s32.totalorder %s25, 1
      %p154 = por %p152, %p153
      %p155 = scmp.ne.s32.totalorder %s147, %s150
      %p156 = scmp.eq.s32.totalorder %s25, 0
      %p157 = por %p155, %p156
      %p158 = scmp.ne.s32.totalorder %s147, %s150
      %p159 = scmp.eq.s32.totalorder %s30, 1
      %p160 = por %p158, %p159
      %p161 = scmp.ne.s32.totalorder %s150, %s151
      %p162 = scmp.eq.s32.totalorder %s30, 0
      %p163 = por %p161, %p162
      %p164 = scmp.ne.s32.totalorder %s150, %s151
      %p165 = scmp.eq.s32.totalorder %s31, 1
      %p166 = por %p164, %p165
      %p168 = scmp.ne.s32.totalorder %s151, %s167
      %p169 = scmp.eq.s32.totalorder %s31, 0
      %p170 = por %p168, %p169
      %s171 = ssub.s32 %s32, %s44
      %s172 = ssub.s32 %s33, %s40
      %s173 = sor.u32 %s171, %s172
      %p174 = scmp.eq.s32.totalorder %s173, 0
      %s176 = sadd.s32 %s175, 1
      %s177 = scalar_select %p174, %s175, %s176
      %p180 = pneg %p174
      %p181 = scmp.eq.s32.totalorder %s25, 1
      %p182 = por %p180, %p181
      %p183 = scmp.ne.s32.totalorder %s175, %s178
      %p184 = scmp.eq.s32.totalorder %s25, 0
      %p185 = por %p183, %p184
      %p186 = scmp.ne.s32.totalorder %s175, %s178
      %p187 = scmp.eq.s32.totalorder %s30, 1
      %p188 = por %p186, %p187
      %p189 = scmp.ne.s32.totalorder %s178, %s179
      %p190 = scmp.eq.s32.totalorder %s30, 0
      %p191 = por %p189, %p190
      %p192 = scmp.ne.s32.totalorder %s178, %s179
      %p193 = scmp.eq.s32.totalorder %s31, 1
      %p194 = por %p192, %p193
      %p196 = scmp.ne.s32.totalorder %s179, %s195
      %p197 = scmp.eq.s32.totalorder %s31, 0
      %p198 = por %p196, %p197
      %p199 = scmp.le.s32.totalorder 1, %s25
      %p200 = scmp.lt.s32.totalorder %s25, 3
      %p201 = pnand %p199, %p200
      %p202 = pneg %p201
      // Predicated region
      $region9: #{tpu_custom_call.1} parent=5 // pred_check
        _
      $region10: #{tpu_custom_call.1} parent=5 // pred_check_branch
        %204 = sbr.rel (%p201) target = $region12
      $region11: #{tpu_custom_call.1} parent=5 // pred_region
        %s205 = ssub.s32 %s25, 1
        // Predicated region
        $region13: #{tpu_custom_call.1} parent=11 // pred_check
          %p206 = pneg %p114
        $region14: #{tpu_custom_call.1} parent=11 // pred_check_branch
          %208 = sbr.rel (%p206) target = $region16
        $region15: #{tpu_custom_call.1} parent=11 // pred_region
          %s210 = ssub.s32 256, 256
          %211 = vsyncadd [#allocation6], %s210
          %s212 = sshll.u32 [#allocation7], 4
          %s213 = int_to_ptr.vmem [resolvable:$true] %s212
          %218 = dma.hbm_to_vmem [thread:$0]  %s2, 256, %s213, [#allocation6], 64, 64, 4
        $region16: #{tpu_custom_call.1} parent=11 // pred_fallthru
          _
        // Predicated region
        $region17: #{tpu_custom_call.1} parent=11 // pred_check
          %p219 = pneg %p135
        $region18: #{tpu_custom_call.1} parent=11 // pred_check_branch
          %221 = sbr.rel (%p219) target = $region20
        $region19: #{tpu_custom_call.1} parent=11 // pred_region
          %s223 = ssub.s32 256, 256
          %224 = vsyncadd [#allocation9], %s223
          %s225 = sshll.u32 [#allocation8], 4
          %s226 = int_to_ptr.vmem [resolvable:$true] %s225
          %231 = dma.hbm_to_vmem [thread:$0]  %s3, 256, %s226, [#allocation9], 64, 64, 4
        $region20: #{tpu_custom_call.1} parent=11 // pred_fallthru
          _
      $region12: #{tpu_custom_call.1} parent=5 // pred_fallthru
        _
      %p232 = scmp.lt.s32.totalorder %s25, 2
      // Predicated region
      $region21: #{tpu_custom_call.1} parent=5 // pred_check
        %p233 = pneg %p232
      $region22: #{tpu_custom_call.1} parent=5 // pred_check_branch
        %235 = sbr.rel (%p233) target = $region24
      $region23: #{tpu_custom_call.1} parent=5 // pred_region
        // Predicated region
        $region25: #{tpu_custom_call.1} parent=23 // pred_check
          %p236 = pneg %p59
        $region26: #{tpu_custom_call.1} parent=23 // pred_check_branch
          %238 = sbr.rel (%p236) target = $region28
        $region27: #{tpu_custom_call.1} parent=23 // pred_region
          %s239 = sand.u32 %s49, 1
          %s240 = scalar_lea.sflag [#allocation3], %s239
          %s241 = sand.u32 %s49, 1
          %s242 = smul.addr %s241, 4
          %s243 = scalar_lea.vmem [#allocation2], %s242
          %s245 = ssub.s32 64, 64
          %246 = vsyncadd %s240, %s245
          %s247 = sadd.s32 %s33, %s32
          %s248 = smul.addr %s247, 64
          %s249 = scalar_lea.hbm %s0, %s248
          %s251 = sshll.u32 %s243, 4
          %s252 = int_to_ptr.vmem [resolvable:$true] %s251
          %254 = dma.hbm_to_vmem [thread:$0]  %s249, 64, %s252, %s240
        $region28: #{tpu_custom_call.1} parent=23 // pred_fallthru
          _
        // Predicated region
        $region29: #{tpu_custom_call.1} parent=23 // pred_check
          %p255 = pneg %p87
        $region30: #{tpu_custom_call.1} parent=23 // pred_check_branch
          %257 = sbr.rel (%p255) target = $region32
        $region31: #{tpu_custom_call.1} parent=23 // pred_region
          %s258 = sand.u32 %s25, 1
          %s259 = scalar_lea.sflag [#allocation6], %s258
          %s260 = sand.u32 %s77, 1
          %s261 = smul.addr %s260, 4
          %s262 = scalar_lea.vmem [#allocation5], %s261
          %s264 = ssub.s32 64, 64
          %265 = vsyncadd %s259, %s264
          %s266 = sadd.s32 %s33, %s32
          %s267 = smul.addr %s266, 64
          %s268 = scalar_lea.hbm %s1, %s267
          %s270 = sshll.u32 %s262, 4
          %s271 = int_to_ptr.vmem [resolvable:$true] %s270
          %273 = dma.hbm_to_vmem [thread:$0]  %s268, 64, %s271, %s259
        $region32: #{tpu_custom_call.1} parent=23 // pred_fallthru
          _
      $region24: #{tpu_custom_call.1} parent=5 // pred_fallthru
        _
      %p274 = scmp.le.s32.totalorder 1, %s25
      %p275 = scmp.lt.s32.totalorder %s25, 3
      %p276 = pnand %p274, %p275
      %p277 = pneg %p276
      // Predicated region
      $region33: #{tpu_custom_call.1} parent=5 // pred_check
        _
      $region34: #{tpu_custom_call.1} parent=5 // pred_check_branch
        %279 = sbr.rel (%p276) target = $region36
      $region35: #{tpu_custom_call.1} parent=5 // pred_region
        %s280 = ssub.s32 %s25, 1
        %s281 = sand.u32 %s52, 1
        %s282 = scalar_lea.sflag [#allocation3], %s281
        %s283 = sand.u32 %s52, 1
        %s284 = smul.addr %s283, 4
        %s285 = scalar_lea.vmem [#allocation2], %s284
        // Predicated region
        $region37: #{tpu_custom_call.1} parent=35 // pred_check
          %p286 = pneg %p65
        $region38: #{tpu_custom_call.1} parent=35 // pred_check_branch
          %288 = sbr.rel (%p286) target = $region40
        $region39: #{tpu_custom_call.1} parent=35 // pred_region
          %289 = dma.done %s282, 64
        $region40: #{tpu_custom_call.1} parent=35 // pred_fallthru
          _
        %s290 = sand.u32 %s30, 1
        %s291 = scalar_lea.sflag [#allocation6], %s290
        %s292 = sand.u32 %s80, 1
        %s293 = smul.addr %s292, 4
        %s294 = scalar_lea.vmem [#allocation5], %s293
        // Predicated region
        $region41: #{tpu_custom_call.1} parent=35 // pred_check
          %p295 = pneg %p93
        $region42: #{tpu_custom_call.1} parent=35 // pred_check_branch
          %297 = sbr.rel (%p295) target = $region44
        $region43: #{tpu_custom_call.1} parent=35 // pred_region
          %298 = dma.done %s291, 64
        $region44: #{tpu_custom_call.1} parent=35 // pred_fallthru
          _
        // Predicated region
        $region45: #{tpu_custom_call.1} parent=35 // pred_check
          %p299 = pneg %p114
        $region46: #{tpu_custom_call.1} parent=35 // pred_check_branch
          %301 = sbr.rel (%p299) target = $region48
        $region47: #{tpu_custom_call.1} parent=35 // pred_region
          %302 = dma.done [#allocation6], 256
        $region48: #{tpu_custom_call.1} parent=35 // pred_fallthru
          _
        // Predicated region
        $region49: #{tpu_custom_call.1} parent=35 // pred_check
          %p303 = pneg %p135
        $region50: #{tpu_custom_call.1} parent=35 // pred_check_branch
          %305 = sbr.rel (%p303) target = $region52
        $region51: #{tpu_custom_call.1} parent=35 // pred_region
          %306 = dma.done [#allocation9], 256
        $region52: #{tpu_custom_call.1} parent=35 // pred_fallthru
          _
        %s307 = sand.u32 %s52, 1
        %s308 = scalar_lea.sflag [#allocation3], %s307
        %s309 = sand.u32 %s52, 1
        %s310 = smul.addr %s309, 4
        %s311 = scalar_lea.vmem [#allocation2], %s310
        %p312 = pneg %p65
        %p313 = pneg %p62
        %s314 = sand.u32 %s30, 1
        %s315 = scalar_lea.sflag [#allocation6], %s314
        %s316 = sand.u32 %s80, 1
        %s317 = smul.addr %s316, 4
        %s318 = scalar_lea.vmem [#allocation5], %s317
        %p319 = pneg %p93
        %p320 = pneg %p90
        %p321 = pneg %p114
        %p322 = pneg %p111
        %p323 = pneg %p135
        %p324 = pneg %p132
        %p325 = pneg %p163
        %p326 = pneg %p160
        %s327 = sand.u32 %s150, 1
        %s328 = scalar_lea.sflag [#allocation4], %s327
        %s329 = sand.u32 %s150, 1
        %s330 = smul.addr %s329, 8
        %s331 = scalar_lea.vmem [#allocation10], %s330
        %p332 = pneg %p191
        %p333 = pneg %p188
        %s334 = sand.u32 %s178, 1
        %s335 = scalar_lea.sflag [#allocation12], %s334
        %s336 = sand.u32 %s178, 1
        %s337 = smul.addr %s336, 8
        %s338 = scalar_lea.vmem [#allocation11], %s337
        %v340 = vld [vmem:[%s285] sm:$0xf]
        %v341 = vld [vmem:[#allocation7] sm:$0xf]
        %v342 = vld [vmem:[#allocation7 + $0x4] sm:$0xf]
        %v343 = vld [vmem:[#allocation7 + $0x8] sm:$0xf]
        %v344 = vld [vmem:[#allocation7 + $0xc] sm:$0xf]
        %v349 = vunpack.c.l.b16 %v341
        %v350 = vunpack.c.l.b16 %v342
        %v351 = vunpack.c.l.b16 %v343
        %v352 = vunpack.c.l.b16 %v344
        %v353 = vpack.c.b16 %v350, %v349
        %v354 = vpack.c.b16 %v352, %v351
        %vm357 = vcmask 261120
        %v359 = vsel %vm357, %v340, 0
        %361 = vmatprep.subr.bf16.mxu0 0
        %362 = vmatpush1.bf16.msra.mxu0 0
        %363 = vmatprep.subr.bf16.mxu0 0
        %364 = vmatpush1.bf16.msra.mxu0 0
        %365 = vmatprep.subr.bf16.mxu0 0
        %366 = vmatpush1.bf16.msra.mxu0 0
        %367 = vmatprep.subr.bf16.mxu0 0
        %368 = vmatpush1.bf16.msra.mxu0 0
        %369 = vmatprep.subr.bf16.mxu0 0
        %370 = vmatpush1.bf16.msra.mxu0 0
        %371 = vmatprep.subr.bf16.mxu0 0
        %372 = vmatpush1.bf16.msra.mxu0 0
        %373 = vmatprep.subr.bf16.mxu0 0
        %374 = vmatpush1.bf16.msra.mxu0 %v354
        %375 = vmatprep.subr.bf16.mxu0 0
        %376 = vmatpush1.bf16.msra.mxu0 %v353
        %377 = vmatprep.subr.bf16.mxu0 0
        %378 = vmatpush2.bf16.msra.mxu0 0
        %379 = vmatprep.subr.bf16.mxu0 0
        %380 = vmatpush2.bf16.msra.mxu0 0
        %381 = vmatprep.subr.bf16.mxu0 0
        %382 = vmatpush2.bf16.msra.mxu0 0
        %383 = vmatprep.subr.bf16.mxu0 0
        %384 = vmatpush2.bf16.msra.mxu0 0
        %385 = vmatprep.subr.bf16.mxu0 0
        %386 = vmatpush2.bf16.msra.mxu0 0
        %387 = vmatprep.subr.bf16.mxu0 0
        %388 = vmatpush2.bf16.msra.mxu0 0
        %389 = vmatprep.subr.bf16.mxu0 0
        %390 = vmatpush2.bf16.msra.mxu0 0
        %391 = vmatprep.subr.bf16.mxu0 0
        %392 = vmatpush2.bf16.msra.mxu0 0
        %393 = vmatprep.mubr.bf16.mxu0 0
        %394 = vmatmul.mubr.bf16.gmra.mxu0 %v359
        %v395 = vpop.f32.mrf.mxu0
        %v396 = vadd.f32 0.0, %v395
        %v397 = vpop.f32.mrf.mxu0
        %v398 = vpop.f32.mrf.mxu0
        %v399 = vpop.f32.mrf.mxu0
        %400 = vdwg.mxu0
        %v401 = vld [vmem:[%s294] sm:$0xf]
        %v402 = vld [vmem:[#allocation8] sm:$0xf]
        %v403 = vld [vmem:[#allocation8 + $0x4] sm:$0xf]
        %v404 = vld [vmem:[#allocation8 + $0x8] sm:$0xf]
        %v405 = vld [vmem:[#allocation8 + $0xc] sm:$0xf]
        %v410 = vunpack.c.l.b16 %v402
        %v411 = vunpack.c.l.b16 %v403
        %v412 = vunpack.c.l.b16 %v404
        %v413 = vunpack.c.l.b16 %v405
        %v414 = vpack.c.b16 %v411, %v410
        %v415 = vpack.c.b16 %v413, %v412
        %v419 = vsel %vm357, %v401, 0
        %421 = vmatprep.subr.bf16.mxu0 0
        %422 = vmatpush1.bf16.msra.mxu0 0
        %423 = vmatprep.subr.bf16.mxu0 0
        %424 = vmatpush1.bf16.msra.mxu0 0
        %425 = vmatprep.subr.bf16.mxu0 0
        %426 = vmatpush1.bf16.msra.mxu0 0
        %427 = vmatprep.subr.bf16.mxu0 0
        %428 = vmatpush1.bf16.msra.mxu0 0
        %429 = vmatprep.subr.bf16.mxu0 0
        %430 = vmatpush1.bf16.msra.mxu0 0
        %431 = vmatprep.subr.bf16.mxu0 0
        %432 = vmatpush1.bf16.msra.mxu0 0
        %433 = vmatprep.subr.bf16.mxu0 0
        %434 = vmatpush1.bf16.msra.mxu0 %v415
        %435 = vmatprep.subr.bf16.mxu0 0
        %436 = vmatpush1.bf16.msra.mxu0 %v414
        %437 = vmatprep.subr.bf16.mxu0 0
        %438 = vmatpush2.bf16.msra.mxu0 0
        %439 = vmatprep.subr.bf16.mxu0 0
        %440 = vmatpush2.bf16.msra.mxu0 0
        %441 = vmatprep.subr.bf16.mxu0 0
        %442 = vmatpush2.bf16.msra.mxu0 0
        %443 = vmatprep.subr.bf16.mxu0 0
        %444 = vmatpush2.bf16.msra.mxu0 0
        %445 = vmatprep.subr.bf16.mxu0 0
        %446 = vmatpush2.bf16.msra.mxu0 0
        %447 = vmatprep.subr.bf16.mxu0 0
        %448 = vmatpush2.bf16.msra.mxu0 0
        %449 = vmatprep.subr.bf16.mxu0 0
        %450 = vmatpush2.bf16.msra.mxu0 0
        %451 = vmatprep.subr.bf16.mxu0 0
        %452 = vmatpush2.bf16.msra.mxu0 0
        %453 = vmatprep.mubr.bf16.mxu0 0
        %454 = vmatmul.mubr.bf16.gmra.mxu0 %v419
        %v455 = vpop.f32.mrf.mxu0
        %v456 = vadd.f32 0.0, %v455
        %v457 = vpop.f32.mrf.mxu0
        %v458 = vpop.f32.mrf.mxu0
        %v459 = vpop.f32.mrf.mxu0
        %460 = vdwg.mxu0
        %v461 = vpack.c.bf16 %v396, %v396
        %vm462 = vcmask 125952
        %463 = vst.msk [vmem:[%s331] sm:$0xf] %vm462, %v461
        %v464 = vpack.c.bf16 %v456, %v456
        %465 = vst.msk [vmem:[%s338] sm:$0xf] %vm462, %v464
        %v467 = vunpack.c.l.b16 %v461
        %v468 = vpack.c.b16 %v467, %v467
        %469 = vrot.lane.b32.xlu0 %v468, 112
        %v470 = vpop.permute.xlu0 %469
        %s472 = scalar_lea.vmem %s331, 4 [#allocation10]
        %473 = vst.msk [vmem:[%s472] sm:$0xf] %vm462, %v470
        %v475 = vunpack.c.l.b16 %v464
        %v476 = vpack.c.b16 %v475, %v475
        %477 = vrot.lane.b32.xlu0 %v476, 112
        %v478 = vpop.permute.xlu0 %477
        %s480 = scalar_lea.vmem %s338, 4 [#allocation11]
        %481 = vst.msk [vmem:[%s480] sm:$0xf] %vm462, %v478
        %s482 = sand.u32 %s150, 1
        %s483 = scalar_lea.sflag [#allocation4], %s482
        %s484 = sand.u32 %s150, 1
        %s485 = smul.addr %s484, 8
        %s486 = scalar_lea.vmem [#allocation10], %s485
        %s487 = sand.u32 %s178, 1
        %s488 = scalar_lea.sflag [#allocation12], %s487
        %s489 = sand.u32 %s178, 1
        %s490 = smul.addr %s489, 8
        %s491 = scalar_lea.vmem [#allocation11], %s490
        // Predicated region
        $region53: #{tpu_custom_call.1} parent=35 // pred_check
          %p492 = pneg %p160
        $region54: #{tpu_custom_call.1} parent=35 // pred_check_branch
          %494 = sbr.rel (%p492) target = $region56
        $region55: #{tpu_custom_call.1} parent=35 // pred_region
          %s496 = ssub.s32 128, 128
          %497 = vsyncadd %s483, %s496
          %s498 = smul.addr %s34, 2
          %s499 = sadd.s32 %s35, %s498
          %s500 = smul.addr %s499, 64
          %s501 = scalar_lea.hbm %s4, %s500
          %s502 = sshll.u32 %s486, 4
          %s503 = int_to_ptr.vmem [resolvable:$true] %s502
          %508 = dma.vmem_to_hbm [thread:$0]  %s503, 128, %s501, %s483, 64, 64, 4
        $region56: #{tpu_custom_call.1} parent=35 // pred_fallthru
          _
        // Predicated region
        $region57: #{tpu_custom_call.1} parent=35 // pred_check
          %p509 = pneg %p188
        $region58: #{tpu_custom_call.1} parent=35 // pred_check_branch
          %511 = sbr.rel (%p509) target = $region60
        $region59: #{tpu_custom_call.1} parent=35 // pred_region
          %s513 = ssub.s32 128, 128
          %514 = vsyncadd %s488, %s513
          %s515 = smul.addr %s34, 2
          %s516 = sadd.s32 %s35, %s515
          %s517 = smul.addr %s516, 64
          %s518 = scalar_lea.hbm %s5, %s517
          %s519 = sshll.u32 %s491, 4
          %s520 = int_to_ptr.vmem [resolvable:$true] %s519
          %525 = dma.vmem_to_hbm [thread:$0]  %s520, 128, %s518, %s488, 64, 64, 4
        $region60: #{tpu_custom_call.1} parent=35 // pred_fallthru
          _
      $region36: #{tpu_custom_call.1} parent=5 // pred_fallthru
        _
      %p526 = scmp.le.s32.totalorder 2, %s25
      // Predicated region
      $region61: #{tpu_custom_call.1} parent=5 // pred_check
        %p527 = pneg %p526
      $region62: #{tpu_custom_call.1} parent=5 // pred_check_branch
        %529 = sbr.rel (%p527) target = $region64
      $region63: #{tpu_custom_call.1} parent=5 // pred_region
        %s530 = ssub.s32 %s25, 2
        // Predicated region
        $region65: #{tpu_custom_call.1} parent=63 // pred_check
          %p531 = pneg %p166
        $region66: #{tpu_custom_call.1} parent=63 // pred_check_branch
          %533 = sbr.rel (%p531) target = $region68
        $region67: #{tpu_custom_call.1} parent=63 // pred_region
          %s534 = sand.u32 %s151, 1
          %s535 = scalar_lea.sflag [#allocation4], %s534
          %s536 = sand.u32 %s151, 1
          %s537 = smul.addr %s536, 8
          %s538 = scalar_lea.vmem [#allocation10], %s537
          %539 = dma.done %s535, 128
        $region68: #{tpu_custom_call.1} parent=63 // pred_fallthru
          _
        // Predicated region
        $region69: #{tpu_custom_call.1} parent=63 // pred_check
          %p540 = pneg %p194
        $region70: #{tpu_custom_call.1} parent=63 // pred_check_branch
          %542 = sbr.rel (%p540) target = $region72
        $region71: #{tpu_custom_call.1} parent=63 // pred_region
          %s543 = sand.u32 %s179, 1
          %s544 = scalar_lea.sflag [#allocation12], %s543
          %s545 = sand.u32 %s179, 1
          %s546 = smul.addr %s545, 8
          %s547 = scalar_lea.vmem [#allocation11], %s546
          %548 = dma.done %s544, 128
        $region72: #{tpu_custom_call.1} parent=63 // pred_fallthru
          _
      $region64: #{tpu_custom_call.1} parent=5 // pred_fallthru
        _
    $region6: #{tpu_custom_call.1} parent=1 // loop_footer
      %s29 = sadd.s32 1, %s25
    $region7: #{tpu_custom_call.1} parent=1 // loop_footer_branch
      %24 = sbr.rel target = $region3
    $region8: #{tpu_custom_call.1} parent=1 // loop_exit
      _
    %549 = vsyncpa [#allocation3], 1
    %s550 = scalar_lea.sflag [#allocation3], 1
    %551 = vsyncpa %s550, 1
    %552 = vsyncpa [#allocation6], 1
    %s553 = scalar_lea.sflag [#allocation6], 1
    %554 = vsyncpa %s553, 1
    %555 = vsyncpa [#allocation9], 1
    %556 = vsyncpa [#allocation4], 1
    %s557 = scalar_lea.sflag [#allocation4], 1
    %558 = vsyncpa %s557, 1
    %559 = vsyncpa [#allocation12], 1
    %s560 = scalar_lea.sflag [#allocation12], 1
    %561 = vsyncpa %s560, 1

</llo_original>
